<compile_context>
chip_gen: v7x
topology: tpu7x:2x2x1
jax: 0.10.0
libtpu: 0.0.40
codegen_flags: <defaults>
</compile_context>

<pallas_src>
import functools

import jax
import jax.numpy as jnp
from jax.experimental import pallas as pl
from jax.experimental.pallas import tpu as pltpu


HEAD_WIDTH = 128                    # lane-dense output slab width
VMEM_LIMIT = 48 * 1024 * 1024       # fits v7x (64 MiB/TC); ample on v5e/v6e

# weight / bias order fed to the fused kernel
_WEIGHT_ORDER = ("wb", "bb", "wt", "bt", "wgc", "wgp", "bg",
                 "wa", "ba", "w2b", "b2b", "w3b", "b3b", "wh", "bh")


def _round_up(x, m):
    return ((x + m - 1) // m) * m


def _pick_tile(hw, tile_hw):
    # bf16 inputs pack (16, 128) sublane tiles -> keep the row tile a multiple of 16
    t = min(tile_hw, _round_up(hw, 16))
    t = _round_up(t, 16)
    return t, _round_up(hw, t)


@functools.lru_cache(maxsize=None)
def _single_buffer_weights_supported():
    """Probe whether this jax build accepts pipeline_mode=pl.Buffered(1) on a
    top-level pallas_call BlockSpec (single-buffered grid-invariant weights)."""
    try:
        def _k(x_ref, o_ref):
            o_ref[...] = x_ref[...]
        spec = pl.BlockSpec((8, 128), lambda i: (0, 0),
                            pipeline_mode=pl.Buffered(1))
        pl.pallas_call(
            _k,
            out_shape=jax.ShapeDtypeStruct((8, 128), jnp.float32),
            grid=(1,),
            in_specs=[spec],
            out_specs=pl.BlockSpec((8, 128), lambda i: (0, 0)),
        )(jnp.zeros((8, 128), jnp.float32))
        return True
    except Exception:       # older / stricter builds: fall back to default buffering
        return False


def _const_spec(shape):
    """BlockSpec for a grid-invariant weight (constant index_map); single-
    buffered when supported to reclaim VMEM / descriptor work."""
    idx = lambda b, i: (0,) * len(shape)
    if _single_buffer_weights_supported():
        return pl.BlockSpec(shape, idx, pipeline_mode=pl.Buffered(1))
    return pl.BlockSpec(shape, idx)


# ----------------------------------------------------------------------------
# Pallas kernels
# ----------------------------------------------------------------------------
def _mm(x, w_ref):
    return jnp.dot(x, w_ref[...], preferred_element_type=jnp.float32)


def _feat_kernel(rows_ref, pe_ref, wb_ref, bb_ref, feat_ref):
    """Bootstrap: backbone patch-conv (pixel norm folded) + PE + ReLU features."""
    feat = jnp.maximum(_mm(rows_ref[0], wb_ref) + bb_ref[...], 0.0)
    feat = feat + pe_ref[...].astype(jnp.float32)
    feat_ref[0] = feat.astype(feat_ref.dtype)


def _level_kernel(cur_ref, pfeat_ref, pe_ref,
                  wb_ref, bb_ref, wt_ref, bt_ref,
                  wgc_ref, wgp_ref, bg_ref,
                  wa_ref, ba_ref, w2b_ref, b2b_ref, w3b_ref, b3b_ref,
                  wh_ref, bh_ref,
                  out_ref, cfeat_ref):
    f32 = jnp.float32
    bf16 = jnp.bfloat16
    Cf = pe_ref.shape[-1]

    pe = pe_ref[...].astype(f32)

    # current-frame backbone: stride-s patch-embedding conv with the pixel
    # normalization folded into wb/bb, plus learned positional embedding.
    cur = jnp.maximum(_mm(cur_ref[0], wb_ref) + bb_ref[...], 0.0) + pe
    cfeat_ref[0] = cur.astype(bf16)            # cache for the next timestep

    # previous-frame features arrive pre-computed (cross-frame cache) -> the
    # expensive (M, K) backbone matmul is done exactly once per frame.
    # temporal head (DeformableTransformer stand-in): MLP on prev features.
    prev_t = jnp.maximum(_mm(pfeat_ref[0], wt_ref) + bt_ref[...], 0.0)

    # per-position gate: single fused VPU multiply + one XLU lane reduce.
    g = jax.nn.sigmoid(
        jnp.sum(cur * wgc_ref[...] + prev_t * wgp_ref[...], axis=-1, keepdims=True)
        + bg_ref[...])
    fused = g * cur + (1.0 - g) * prev_t
    fused_bf = fused.astype(bf16)              # one cast, reused

    # trunk layer 1: [FCOS2D | FCOS3D] fused into one 128 -> 256 matmul.
    ta = jnp.maximum(_mm(fused_bf, wa_ref) + ba_ref[...], 0.0)
    t2 = jnp.maximum(_mm(ta[:, :Cf].astype(bf16), w2b_ref) + b2b_ref[...], 0.0)
    t3 = jnp.maximum(_mm(ta[:, Cf:].astype(bf16), w3b_ref) + b3b_ref[...], 0.0)

    # all head projections: one 256 -> 128 lane-dense matmul.
    tb = jnp.concatenate([t2, t3], axis=-1).astype(bf16)
    out = _mm(tb, wh_ref) + bh_ref[...]
    out_ref[0] = out.astype(out_ref.dtype)


# ----------------------------------------------------------------------------
# pallas_call wrappers
# ----------------------------------------------------------------------------
def feat_level_forward(rows, pe, wb, bb, *, tile_hw=1024):
    """rows: (B, hw, K) bf16 im2col rows; pe: (hw, Cf) bf16 -> (B, hw, Cf) bf16."""
    B, hw, K = rows.shape
    Cf = pe.shape[1]
    t, hw_pad = _pick_tile(hw, tile_hw)
    if hw_pad != hw:
        rows = jnp.pad(rows, ((0, 0), (0, hw_pad - hw), (0, 0)))
        pe = jnp.pad(pe, ((0, hw_pad - hw), (0, 0)))
    n_t = hw_pad // t

    def row_spec(c):
        return pl.BlockSpec((1, t, c), lambda b, i: (b, i, 0))

    Mp = B * hw_pad
    feat = pl.pallas_call(
        _feat_kernel,
        out_shape=jax.ShapeDtypeStruct((B, hw_pad, Cf), jnp.bfloat16),
        grid=(B, n_t),
        in_specs=[row_spec(K),
                  pl.BlockSpec((t, Cf), lambda b, i: (i, 0)),
                  _const_spec(wb.shape), _const_spec(bb.shape)],
        out_specs=row_spec(Cf),
        compiler_params=pltpu.CompilerParams(
            dimension_semantics=("parallel", "parallel"),
            vmem_limit_bytes=VMEM_LIMIT),
        cost_estimate=pl.CostEstimate(
            flops=int(2 * Mp * K * Cf),
            transcendentals=0,
            bytes_accessed=int(2 * Mp * K + 2 * hw_pad * Cf + 2 * Mp * Cf
                               + 2 * K * Cf)),
    )(rows, pe, wb, bb)
    return feat[:, :hw, :]


def fused_level_forward(cur_rows, prev_feat, pe, kp, *, tile_hw=1024):
    """cur_rows: (B, hw, K) bf16; prev_feat: (B, hw, Cf) bf16; pe: (hw, Cf) bf16.

    Returns (slab (B, hw, 128) f32, cur_feat (B, hw, Cf) bf16).
    """
    B, hw, K = cur_rows.shape
    Cf = pe.shape[1]
    t, hw_pad = _pick_tile(hw, tile_hw)
    if hw_pad != hw:
        pad3 = ((0, 0), (0, hw_pad - hw), (0, 0))
        cur_rows = jnp.pad(cur_rows, pad3)
        prev_feat = jnp.pad(prev_feat, pad3)
        pe = jnp.pad(pe, ((0, hw_pad - hw), (0, 0)))
    n_t = hw_pad // t

    def row_spec(c):
        return pl.BlockSpec((1, t, c), lambda b, i: (b, i, 0))

    in_specs = [row_spec(K), row_spec(Cf),
                pl.BlockSpec((t, Cf), lambda b, i: (i, 0))]
    in_specs += [_const_spec(kp[name].shape) for name in _WEIGHT_ORDER]

    Mp = B * hw_pad
    flops = int(2 * Mp * (K * Cf + 5 * Cf * Cf + 2 * Cf * HEAD_WIDTH))
    bytes_accessed = int(2 * Mp * K + 2 * Mp * Cf + 2 * hw_pad * Cf
                         + 4 * Mp * HEAD_WIDTH + 2 * Mp * Cf
                         + 2 * (K * Cf + 5 * Cf * Cf + 2 * Cf * HEAD_WIDTH))

    slab, cur_feat = pl.pallas_call(
        _level_kernel,
        out_shape=(jax.ShapeDtypeStruct((B, hw_pad, HEAD_WIDTH), jnp.float32),
                   jax.ShapeDtypeStruct((B, hw_pad, Cf), jnp.bfloat16)),
        grid=(B, n_t),
        in_specs=in_specs,
        out_specs=(row_spec(HEAD_WIDTH), row_spec(Cf)),
        compiler_params=pltpu.CompilerParams(
            dimension_semantics=("parallel", "parallel"),
            vmem_limit_bytes=VMEM_LIMIT),
        cost_estimate=pl.CostEstimate(
            flops=flops, transcendentals=int(Mp), bytes_accessed=bytes_accessed),
    )(cur_rows, prev_feat, pe, *(kp[name] for name in _WEIGHT_ORDER))
    return slab[:, :hw, :], cur_feat[:, :hw, :]


# ----------------------------------------------------------------------------
# plain-JAX glue
# ----------------------------------------------------------------------------
def patchify(x, s):
    """NCHW image -> (B, h*w, C*s*s) rows of s x s patches (stride-s conv im2col)."""
    B, C, H, W = x.shape
    h, w = H // s, W // s
    x = x.reshape(B, C, h, s, w, s)
    x = x.transpose(0, 2, 4, 1, 3, 5)  # B, h, w, C, s, s
    return x.reshape(B, h * w, C * s * s), (h, w)


def compute_locations_per_level(h, w, stride, offset="half"):
    off = stride / 2.0 if offset == "half" else 0.0
    shifts_x = jnp.arange(w, dtype=jnp.float32) * stride + off
    shifts_y = jnp.arange(h, dtype=jnp.float32) * stride + off
    sy, sx = jnp.meshgrid(shifts_y, shifts_x, indexing="ij")
    return jnp.stack([sx.reshape(-1), sy.reshape(-1)], axis=1)  # (h*w, 2)


def _init_linear(key, k, n, scale=0.05):
    kw, _ = jax.random.split(key)
    w = scale * jax.random.normal(kw, (k, n), jnp.float32)
    b = jnp.zeros((n,), jnp.float32)
    return w, b


class DD3DDeformAttMultiDepthPallas:
    def __init__(self, key, *, in_channels=3, feat_channels=128,
                 strides=(8, 16), num_classes=4, max_embed=64):
        self.C = in_channels
        self.Cf = feat_channels
        self.strides = strides
        self.num_classes = num_classes
        self._feat_cache = {}   # per-level cached post-backbone(+PE) features

        # (name, channels) in output-slab column order
        self.head_dims = [
            ("logits", num_classes), ("box2d_reg", 4), ("centerness", 1),
            ("box3d_quat", 4), ("box3d_ctr", 2), ("box3d_depth", 1),
            ("box3d_size", 3), ("box3d_conf", 1),
            ("dense_depth", 3),   # multi-depth: prev / cur / future
            ("ego_pose", 6),
        ]
        self.total_head_dim = sum(d for _, d in self.head_dims)
        assert self.total_head_dim <= HEAD_WIDTH

        pixel_mean = jnp.array([103.53, 116.28, 123.675], jnp.float32)[:in_channels]
        pixel_std = jnp.array([57.375, 57.12, 58.395], jnp.float32)[:in_channels]

        keys = iter(jax.random.split(key, 64))
        Cf = feat_channels
        bf16 = jnp.bfloat16

        # --- backbone: per-level stride-s patch-embedding conv, pixel norm folded ---
        self.backbone_folded = []
        for s in strides:
            K = in_channels * s * s
            w, b = _init_linear(next(keys), K, Cf)
            inv_std_row = jnp.repeat(1.0 / pixel_std, s * s)   # (K,)
            mean_row = jnp.repeat(pixel_mean, s * s)           # (K,)
            w_fold = w * inv_std_row[:, None]
            b_fold = b - (mean_row * inv_std_row) @ w
            self.backbone_folded.append(
                {"w": w_fold.astype(bf16), "b": b_fold.reshape(1, Cf)})

        # --- learned positional encoder (PositionEmbeddingLearned) ---
        half = Cf // 2
        self.row_embed = 0.05 * jax.random.normal(next(keys), (max_embed, half), jnp.float32)
        self.col_embed = 0.05 * jax.random.normal(next(keys), (max_embed, half), jnp.float32)

        # --- temporal head (DeformableTransformer stand-in) + gate ---
        wt, bt = _init_linear(next(keys), Cf, Cf)
        wgc, bg = _init_linear(next(keys), Cf, 1)
        wgp, _ = _init_linear(next(keys), Cf, 1)

        # --- FCOS2D head (shared across levels) ---
        w2a, b2a = _init_linear(next(keys), Cf, Cf)
        w2b, b2b = _init_linear(next(keys), Cf, Cf)
        wl, bl = _init_linear(next(keys), Cf, num_classes)
        wr, br = _init_linear(next(keys), Cf, 4)
        wc, bc = _init_linear(next(keys), Cf, 1)

        # --- FCOS3D head (shared across levels) ---
        w3a, b3a = _init_linear(next(keys), Cf, Cf)
        w3b, b3b = _init_linear(next(keys), Cf, Cf)
        wq, bq = _init_linear(next(keys), Cf, 4)
        wct, bct = _init_linear(next(keys), Cf, 2)
        wd, bd = _init_linear(next(keys), Cf, 1)
        ws, bs = _init_linear(next(keys), Cf, 3)
        wcf, bcf = _init_linear(next(keys), Cf, 1)
        wdd, bdd = _init_linear(next(keys), Cf, 3)   # multi-depth dense depth
        wep, bep = _init_linear(next(keys), Cf, 6)   # ego pose

        # Pack all head projections into disjoint columns; combined bias in one row.
        nc = num_classes
        w2h = jnp.zeros((Cf, HEAD_WIDTH), jnp.float32)
        w3h = jnp.zeros((Cf, HEAD_WIDTH), jnp.float32)
        bh = jnp.zeros((1, HEAD_WIDTH), jnp.float32)
        w2h = w2h.at[:, 0:nc].set(wl).at[:, nc:nc + 4].set(wr).at[:, nc + 4:nc + 5].set(wc)
        bh = bh.at[0, 0:nc].set(bl).at[0, nc:nc + 4].set(br).at[0, nc + 4:nc + 5].set(bc)
        off = nc + 5
        for wmat, bvec, d in ((wq, bq, 4), (wct, bct, 2), (wd, bd, 1), (ws, bs, 3),
                              (wcf, bcf, 1), (wdd, bdd, 3), (wep, bep, 6)):
            w3h = w3h.at[:, off:off + d].set(wmat)
            bh = bh.at[0, off:off + d].set(bvec)
            off += d

        # 256-wide fused trunk / head weights (fills the 2x256x256 MXU on v6e/v7x,
        # FLOP-neutral so harmless on v5e's 128x128 MXUs).
        wa = jnp.concatenate([w2a, w3a], axis=1)                 # (Cf, 2Cf)
        ba = jnp.concatenate([b2a, b3a]).reshape(1, 2 * Cf)
        wh = jnp.concatenate([w2h, w3h], axis=0)                 # (2Cf, 128)

        self.kparams_shared = {
            "wt": wt.astype(bf16), "bt": bt.reshape(1, Cf),
            "wgc": wgc.reshape(1, Cf), "wgp": wgp.reshape(1, Cf),
            "bg": bg.reshape(1, 1),
            "wa": wa.astype(bf16), "ba": ba,
            "w2b": w2b.astype(bf16), "b2b": b2b.reshape(1, Cf),
            "w3b": w3b.astype(bf16), "b3b": b3b.reshape(1, Cf),
            "wh": wh.astype(bf16), "bh": bh,
        }

    def positional_embedding(self, h, w):
        half = self.Cf // 2
        col = self.col_embed[:w]                                    # (w, half)
        row = self.row_embed[:h]                                    # (h, half)
        pe = jnp.concatenate([
            jnp.broadcast_to(col[None, :, :], (h, w, half)),
            jnp.broadcast_to(row[:, None, :], (h, w, half)),
        ], axis=-1)                                                 # (h, w, Cf)
        return pe.reshape(h * w, self.Cf)                           # stored once, no B fold

    def forward(self, images, images_prev, intrinsics=None):
        B = images.shape[0]
        bf16 = jnp.bfloat16

        inv_intrinsics = jnp.linalg.inv(intrinsics) if intrinsics is not None else None
        # TODO(synk): inv_intrinsics feeds the real FCOS3DHead depth un-projection;
        # the synthetic head here does not consume it.
        del inv_intrinsics

        out = {name: [] for name, _ in self.head_dims}
        out["locations"] = []

        for lvl, s in enumerate(self.strides):
            rows_cur, (h, w) = patchify(images, s)        # (B, hw, K)
            pe = self.positional_embedding(h, w).astype(bf16)

            kp = dict(self.kparams_shared)
            kp["wb"] = self.backbone_folded[lvl]["w"]
            kp["bb"] = self.backbone_folded[lvl]["b"]

            prev_feat = self._feat_cache.get(lvl)
            if prev_feat is None:
                # first frame only: bootstrap the previous-frame feature cache
                # (in the video pipeline this was produced when that frame was
                # the current frame, so the backbone runs once per frame).
                rows_prev, _ = patchify(images_prev, s)
                prev_feat = feat_level_forward(rows_prev.astype(bf16), pe,
                                               kp["wb"], kp["bb"])

            slab, cur_feat = fused_level_forward(rows_cur.astype(bf16),
                                                 prev_feat, pe, kp)
            self._feat_cache[lvl] = cur_feat               # cache for next timestep

            Dh = self.total_head_dim
            nhwc = slab[:, :, :Dh].reshape(B, h, w, Dh)
            nchw = jnp.transpose(nhwc, (0, 3, 1, 2))       # one layout op per level

            off = 0
            for name, d in self.head_dims:
                piece = nchw[:, off:off + d]
                off += d
                if name == "box2d_reg":
                    piece = jnp.maximum(piece, 0.0)        # FCOS: non-negative reg
                if name == "ego_pose":
                    # TODO(synk): real head predicts a per-image pose; pooled stand-in.
                    piece = jnp.mean(piece, axis=(2, 3))   # (B, 6)
                out[name].append(piece)

            out["locations"].append(compute_locations_per_level(h, w, s))

        # TODO(synk): training-branch target preparation / FCOS2D-3D / depth /
        # pose losses and the inference-branch NMS / BEV-NMS / Instances
        # post-processing are data-dependent & ragged; raw head outputs returned.
        return out


# ----------------------------------------------------------------------------
if __name__ == "__main__":
    key = jax.random.PRNGKey(0)
    k_img, k_prev, k_next, k_model = jax.random.split(key, 4)

    B, C, H, W = 2, 3, 32, 32
    images_prev = 255.0 * jax.random.uniform(k_prev, (B, C, H, W), jnp.float32)
    images = 255.0 * jax.random.uniform(k_img, (B, C, H, W), jnp.float32)
    images_next = 255.0 * jax.random.uniform(k_next, (B, C, H, W), jnp.float32)
    intrinsics = jnp.tile(
        jnp.array([[100.0, 0.0, 16.0], [0.0, 100.0, 16.0], [0.0, 0.0, 1.0]],
                  jnp.float32)[None], (B, 1, 1))

    model = DD3DDeformAttMultiDepthPallas(
        k_model, in_channels=C, feat_channels=128, strides=(8, 16), num_classes=4)

    # t0: bootstraps the previous-frame feature cache (backbone runs on prev once)
    out_t0 = model.forward(images, images_prev, intrinsics)
    jax.block_until_ready(out_t0)

    # t1: steady state -- previous-frame features come from the cache, so the
    # expensive backbone matmul runs only on the current frame.
    out_t1 = model.forward(images_next, images, intrinsics)
    jax.block_until_ready(out_t1)

    print("KERNEL_OK")
</pallas_src>

<mosaic_0001>
module attributes {stable_mosaic.version = 11 : i64} {
  func.func @_k(%arg0: i32, %arg1: memref<8x128xf32, #tpu.memory_space<vmem>>, %arg2: memref<8x128xf32, #tpu.memory_space<vmem>>) attributes {dimension_semantics = [#tpu.dimension_semantics<arbitrary>], iteration_bounds = array<i64: 1>, scalar_prefetch = 0 : i64, scratch_operands = 0 : i64, tpu.core_type = #tpu.core_type<tc>, window_params = [{pipeline_mode = #tpu.pipeline_mode<synchronous>, transform_indices = @transform_0, window_bounds = array<i64: 8, 128>}, {pipeline_mode = #tpu.pipeline_mode<synchronous>, transform_indices = @transform_1, window_bounds = array<i64: 8, 128>}]} {
    %c0 = arith.constant 0 : index
    %c0_0 = arith.constant 0 : index
    %0 = vector.load %arg1[%c0, %c0_0] : memref<8x128xf32, #tpu.memory_space<vmem>>, vector<8x128xf32>
    %c0_1 = arith.constant 0 : index
    %c0_2 = arith.constant 0 : index
    %1 = vector.load %arg2[%c0_1, %c0_2] : memref<8x128xf32, #tpu.memory_space<vmem>>, vector<8x128xf32>
    tpu.vector_store %arg2[%c0_1, %c0_2], %0 {strides = array<i32>} : memref<8x128xf32, #tpu.memory_space<vmem>>, vector<8x128xf32>,
    return
  }
  func.func @transform_0(%arg0: i32) -> (i32, i32) {
    %c0_i32 = arith.constant 0 : i32
    %c0_i32_0 = arith.constant 0 : i32
    %c0_i32_1 = arith.constant 0 : i32
    return %c0_i32, %c0_i32_0 : i32, i32
  }
  func.func @transform_1(%arg0: i32) -> (i32, i32) {
    %c0_i32 = arith.constant 0 : i32
    %c0_i32_0 = arith.constant 0 : i32
    %c0_i32_1 = arith.constant 0 : i32
    return %c0_i32, %c0_i32_0 : i32, i32
  }
}

module attributes {stable_mosaic.version = 11 : i64} {
  func.func @_feat_kernel(%arg0: i32, %arg1: i32, %arg2: memref<1x16x192xbf16, #tpu.memory_space<vmem>>, %arg3: memref<16x128xbf16, #tpu.memory_space<vmem>>, %arg4: memref<192x128xbf16, #tpu.memory_space<vmem>>, %arg5: memref<1x128xf32, #tpu.memory_space<vmem>>, %arg6: memref<1x16x128xbf16, #tpu.memory_space<vmem>>) attributes {dimension_semantics = [#tpu.dimension_semantics<parallel>, #tpu.dimension_semantics<parallel>], iteration_bounds = array<i64: 2, 1>, scalar_prefetch = 0 : i64, scratch_operands = 0 : i64, tpu.core_type = #tpu.core_type<tc>, window_params = [{transform_indices = @transform_0, window_bounds = array<i64: 1, 16, 192>}, {transform_indices = @transform_1, window_bounds = array<i64: 16, 128>}, {pipeline_mode = #tpu.pipeline_mode<synchronous>, transform_indices = @transform_2, window_bounds = array<i64: 192, 128>}, {pipeline_mode = #tpu.pipeline_mode<synchronous>, transform_indices = @transform_3, window_bounds = array<i64: 1, 128>}, {transform_indices = @transform_4, window_bounds = array<i64: 1, 16, 128>}]} {
    %c0 = arith.constant 0 : index
    %c0_0 = arith.constant 0 : index
    %c0_1 = arith.constant 0 : index
    %0 = vector.load %arg2[%c0, %c0_0, %c0_1] : memref<1x16x192xbf16, #tpu.memory_space<vmem>>, vector<1x16x192xbf16>
    %1 = vector.shape_cast %0 : vector<1x16x192xbf16> to vector<16x192xbf16>
    %c0_2 = arith.constant 0 : index
    %c0_3 = arith.constant 0 : index
    %2 = vector.load %arg4[%c0_2, %c0_3] : memref<192x128xbf16, #tpu.memory_space<vmem>>, vector<192x128xbf16>
    %cst = arith.constant dense<0.000000e+00> : vector<16x128xf32>
    %3 = tpu.matmul %1, %2, %cst {dimension_numbers = #tpu.dot_dimension_numbers<[1], [0], [0], [1], [0, 0, 1, 1], [], []>} : vector<16x192xbf16>, vector<192x128xbf16>, vector<16x128xf32> -> vector<16x128xf32>
    %c0_4 = arith.constant 0 : index
    %c0_5 = arith.constant 0 : index
    %4 = vector.load %arg5[%c0_4, %c0_5] : memref<1x128xf32, #tpu.memory_space<vmem>>, vector<1x128xf32>
    %5 = vector.broadcast %4 : vector<1x128xf32> to vector<16x128xf32>
    %6 = arith.addf %3, %5 : vector<16x128xf32>
    %cst_6 = arith.constant 0.000000e+00 : f32
    %7 = vector.broadcast %cst_6 : f32 to vector<16x128xf32>
    %8 = arith.maximumf %6, %7 : vector<16x128xf32>
    %c0_7 = arith.constant 0 : index
    %c0_8 = arith.constant 0 : index
    %9 = vector.load %arg3[%c0_7, %c0_8] : memref<16x128xbf16, #tpu.memory_space<vmem>>, vector<16x128xbf16>
    %10 = arith.extf %9 : vector<16x128xbf16> to vector<16x128xf32>
    %11 = arith.addf %8, %10 : vector<16x128xf32>
    %12 = arith.truncf %11 : vector<16x128xf32> to vector<16x128xbf16>
    %c0_9 = arith.constant 0 : index
    %c0_10 = arith.constant 0 : index
    %c0_11 = arith.constant 0 : index
    %13 = vector.load %arg6[%c0_9, %c0_10, %c0_11] : memref<1x16x128xbf16, #tpu.memory_space<vmem>>, vector<1x16x128xbf16>
    %14 = vector.shape_cast %13 : vector<1x16x128xbf16> to vector<16x128xbf16>
    %15 = vector.shape_cast %12 : vector<16x128xbf16> to vector<1x16x128xbf16>
    tpu.vector_store %arg6[%c0_9, %c0_10, %c0_11], %15 {strides = array<i32>} : memref<1x16x128xbf16, #tpu.memory_space<vmem>>, vector<1x16x128xbf16>,
    return
  }
  func.func @transform_0(%arg0: i32, %arg1: i32) -> (i32, i32, i32) {
    %c0_i32 = arith.constant 0 : i32
    %c0_i32_0 = arith.constant 0 : i32
    return %arg0, %arg1, %c0_i32 : i32, i32, i32
  }
  func.func @transform_1(%arg0: i32, %arg1: i32) -> (i32, i32) {
    %c0_i32 = arith.constant 0 : i32
    %c0_i32_0 = arith.constant 0 : i32
    return %arg1, %c0_i32 : i32, i32
  }
  func.func @transform_2(%arg0: i32, %arg1: i32) -> (i32, i32) {
    %c0_i32 = arith.constant 0 : i32
    %c0_i32_0 = arith.constant 0 : i32
    %c0_i32_1 = arith.constant 0 : i32
    return %c0_i32, %c0_i32_0 : i32, i32
  }
  func.func @transform_3(%arg0: i32, %arg1: i32) -> (i32, i32) {
    %c0_i32 = arith.constant 0 : i32
    %c0_i32_0 = arith.constant 0 : i32
    %c0_i32_1 = arith.constant 0 : i32
    return %c0_i32, %c0_i32_0 : i32, i32
  }
  func.func @transform_4(%arg0: i32, %arg1: i32) -> (i32, i32, i32) {
    %c0_i32 = arith.constant 0 : i32
    %c0_i32_0 = arith.constant 0 : i32
    return %arg0, %arg1, %c0_i32 : i32, i32, i32
  }
}

</mosaic_0001>

<llo_original>
// kernel: tpu_custom_call.1
$region0: #{tpu_custom_call.1}
  #allocation0 [shape = 'u32[]', space=smem, size = 0x4, offset = 0x4, fixed_abs, tag = 'smem constant byte address 0x4 - core index']
  #allocation1 [shape = 'u32[144,128]{1,0:T(1,128)}', space=vmem, size = 0x12000, scoped, tag = 'internal scratch']
  %s0 = inlined_call_operand.hbm [shape: f32[8,128], index: 0, kind: input, shape index: {}]
  %s1 = inlined_call_operand.hbm [shape: f32[8,128], index: 1, kind: output, shape index: {}]
  %s2 = sld [smem:[#allocation0]]
  $region18: #{tpu_custom_call.1} parent=0
    _
  %s4 = ssub.s32 1, %s2
  %s5 = scalar_select 0, %s4, %s2
  $region1: #{tpu_custom_call.1} parent=0
    #allocation2 [shape = 'u8[4096]{0}', space=vmem, size = 0x1000, scoped, tag = 'input window, operand 0, single buffered']
    #allocation3 [shape = 's32[1]{0}', space=sflag, size = 0x4, scoped, tag = 'scoped memory for tpu_custom_call.1']
    #allocation4 [shape = 's32[1]{0}', space=sflag, size = 0x4, scoped, tag = 'scoped memory for tpu_custom_call.1']
    #allocation5 [shape = 'u8[4096]{0}', space=vmem, size = 0x1000, scoped, tag = 'output window, operand 0, single buffered']
    %6 = vsyncpa [#allocation3], 0
    %7 = vsyncpa [#allocation4], 0
    // Predicated region
    $region2: #{tpu_custom_call.1} parent=1 // pred_check
      _
    $region3: #{tpu_custom_call.1} parent=1 // pred_check_branch
      %9 = sbr.rel (0) target = $region5
    $region4: #{tpu_custom_call.1} parent=1 // pred_region
      %s11 = ssub.s32 128, 128
      %12 = vsyncadd [#allocation3], %s11
      %s14 = sshll.u32 [#allocation2], 4
      %s15 = int_to_ptr.vmem [resolvable:$true] %s14
      %17 = dma.hbm_to_vmem [thread:$0]  %s0, 128, %s15, [#allocation3]
    $region5: #{tpu_custom_call.1} parent=1 // pred_fallthru
      _
    // Predicated region
    $region6: #{tpu_custom_call.1} parent=1 // pred_check
      _
    $region7: #{tpu_custom_call.1} parent=1 // pred_check_branch
      %19 = sbr.rel (0) target = $region9
    $region8: #{tpu_custom_call.1} parent=1 // pred_region
      %20 = dma.done [#allocation3], 128
    $region9: #{tpu_custom_call.1} parent=1 // pred_fallthru
      _
    %v21 = vld [vmem:[#allocation2] sm:$0xff]
    %22 = vst [vmem:[#allocation5] sm:$0xff] %v21
    // Predicated region
    $region10: #{tpu_custom_call.1} parent=1 // pred_check
      _
    $region11: #{tpu_custom_call.1} parent=1 // pred_check_branch
      %24 = sbr.rel (0) target = $region13
    $region12: #{tpu_custom_call.1} parent=1 // pred_region
      %s26 = ssub.s32 128, 128
      %27 = vsyncadd [#allocation4], %s26
      %s29 = sshll.u32 [#allocation5], 4
      %s30 = int_to_ptr.vmem [resolvable:$true] %s29
      %32 = dma.vmem_to_hbm [thread:$0]  %s30, 128, %s1, [#allocation4]
    $region13: #{tpu_custom_call.1} parent=1 // pred_fallthru
      _
    // Predicated region
    $region14: #{tpu_custom_call.1} parent=1 // pred_check
      _
    $region15: #{tpu_custom_call.1} parent=1 // pred_check_branch
      %34 = sbr.rel (0) target = $region17
    $region16: #{tpu_custom_call.1} parent=1 // pred_region
      %35 = dma.done [#allocation4], 128
    $region17: #{tpu_custom_call.1} parent=1 // pred_fallthru
      _
    %36 = vsyncpa [#allocation3], 1
    %37 = vsyncpa [#allocation4], 1

// kernel: tpu_custom_call.1
$region0: #{tpu_custom_call.1}
  #allocation0 [shape = 'u32[]', space=smem, size = 0x4, offset = 0x4, fixed_abs, tag = 'smem constant byte address 0x4 - core index']
  #allocation1 [shape = 'u32[144,128]{1,0:T(1,128)}', space=vmem, size = 0x12000, scoped, tag = 'internal scratch']
  %s0 = inlined_call_operand.hbm [shape: bf16[2,16,192], index: 0, kind: input, shape index: {}]
  %s1 = inlined_call_operand.hbm [shape: bf16[16,128], index: 1, kind: input, shape index: {}]
  %s2 = inlined_call_operand.hbm [shape: bf16[192,128], index: 2, kind: input, shape index: {}]
  %s3 = inlined_call_operand.vmem [shape: f32[1,128], index: 3, kind: input, shape index: {}]
  %s4 = inlined_call_operand.hbm [shape: bf16[2,16,128], index: 4, kind: output, shape index: {}]
  %s5 = sld [smem:[#allocation0]]
  $region61: #{tpu_custom_call.1} parent=0
    _
  %s7 = ssub.s32 1, %s5
  %s8 = scalar_select 0, %s7, %s5
  $region1: #{tpu_custom_call.1} parent=0
    #allocation2 [shape = 'u8[16384]{0}', space=vmem, size = 0x4000, scoped, tag = 'input window, operand 0']
    #allocation3 [shape = 's32[2]{0}', space=sflag, size = 0x8, scoped, tag = 'scoped memory for tpu_custom_call.1']
    #allocation4 [shape = 's32[2]{0}', space=sflag, size = 0x8, scoped, tag = 'scoped memory for tpu_custom_call.1']
    #allocation5 [shape = 'u8[4096]{0}', space=vmem, size = 0x1000, scoped, tag = 'input window, operand 1, single buffered']
    #allocation6 [shape = 's32[1]{0}', space=sflag, size = 0x4, scoped, tag = 'scoped memory for tpu_custom_call.1']
    #allocation7 [shape = 'u8[49152]{0}', space=vmem, size = 0xc000, scoped, tag = 'input window, operand 2, single buffered']
    #allocation8 [shape = 'u8[8192]{0}', space=vmem, size = 0x2000, scoped, tag = 'output window, operand 0']
    %9 = vsyncpa [#allocation3], 0
    %s10 = scalar_lea.sflag [#allocation3], 1
    %11 = vsyncpa %s10, 0
    %12 = vsyncpa [#allocation6], 0
    %13 = vsyncpa [#allocation4], 0
    %s14 = scalar_lea.sflag [#allocation4], 1
    %15 = vsyncpa %s14, 0
    loop: start=0, step=1, limit=4
    $region2: #{tpu_custom_call.1} parent=1 // loop_pre_header
      _
    $region3: #{tpu_custom_call.1} parent=1 // loop_header
      %s17 = sphi 0, %s21
      %p18 = scmp.ge.s32.totalorder %s17, 4
      %s24 = sphi 0, %s36
      %s25 = sphi 0, %s32
      %s26 = sphi 0, %s24
      %s27 = sphi 0, %s25
      %s28 = sphi 0, %s26
      %s29 = sphi 0, %s27
      %s41 = sphi 0, %s43
      %s44 = sphi 0, %s41
      %s45 = sphi 0, %s44
      %s61 = sphi 0, %s45
      %s67 = sphi 0, %s69
      %s70 = sphi 0, %s67
      %s71 = sphi 0, %s70
      %s87 = sphi 0, %s71
      %s91 = sphi 0, %s91
      %s93 = sphi 0, %s91
      %s94 = sphi 0, %s93
      %s108 = sphi 0, %s94
      %s112 = sphi 0, %s112
      %s114 = sphi 0, %s112
      %s115 = sphi 0, %s114
      %s129 = sphi 0, %s115
      %s137 = sphi 0, %s139
      %s140 = sphi 0, %s137
      %s141 = sphi 0, %s140
      %s157 = sphi 0, %s141
    $region4: #{tpu_custom_call.1} parent=1 // loop_header_branch
      %20 = sbr.rel (%p18) target = $region8
    $region5: #{tpu_custom_call.1} parent=1 // loop_body
      %s22 = ssub.s32 %s17, 1
      %s23 = ssub.s32 %s17, 2
      %s30 = sadd.s32 1, %s25
      %p31 = scmp.ge.s32.totalorder %s30, 1
      %s32 = scalar_select %p31, 0, %s30
      %s33 = sadd.s32 1, %s24
      %s34 = scalar_select %p31, %s33, %s24
      %p35 = scmp.ge.s32.totalorder %s34, 2
      %s36 = scalar_select %p35, 0, %s34
      %s37 = ssub.s32 %s24, %s36
      %s38 = ssub.s32 %s25, %s32
      %s39 = sor.u32 %s37, %s38
      %p40 = scmp.eq.s32.totalorder %s39, 0
      %s42 = sadd.s32 %s41, 1
      %s43 = scalar_select %p40, %s41, %s42
      %p46 = pneg %p40
      %p47 = scmp.eq.s32.totalorder %s17, 1
      %p48 = por %p46, %p47
      %p49 = scmp.ne.s32.totalorder %s41, %s44
      %p50 = scmp.eq.s32.totalorder %s17, 0
      %p51 = por %p49, %p50
      %p52 = scmp.ne.s32.totalorder %s41, %s44
      %p53 = scmp.eq.s32.totalorder %s22, 1
      %p54 = por %p52, %p53
      %p55 = scmp.ne.s32.totalorder %s44, %s45
      %p56 = scmp.eq.s32.totalorder %s22, 0
      %p57 = por %p55, %p56
      %p58 = scmp.ne.s32.totalorder %s44, %s45
      %p59 = scmp.eq.s32.totalorder %s23, 1
      %p60 = por %p58, %p59
      %p62 = scmp.ne.s32.totalorder %s45, %s61
      %p63 = scmp.eq.s32.totalorder %s23, 0
      %p64 = por %p62, %p63
      %s65 = ssub.s32 %s25, %s32
      %p66 = scmp.eq.s32.totalorder %s65, 0
      %s68 = sadd.s32 %s67, 1
      %s69 = scalar_select %p66, %s67, %s68
      %p72 = pneg %p66
      %p73 = scmp.eq.s32.totalorder %s17, 1
      %p74 = por %p72, %p73
      %p75 = scmp.ne.s32.totalorder %s67, %s70
      %p76 = scmp.eq.s32.totalorder %s17, 0
      %p77 = por %p75, %p76
      %p78 = scmp.ne.s32.totalorder %s67, %s70
      %p79 = scmp.eq.s32.totalorder %s22, 1
      %p80 = por %p78, %p79
      %p81 = scmp.ne.s32.totalorder %s70, %s71
      %p82 = scmp.eq.s32.totalorder %s22, 0
      %p83 = por %p81, %p82
      %p84 = scmp.ne.s32.totalorder %s70, %s71
      %p85 = scmp.eq.s32.totalorder %s23, 1
      %p86 = por %p84, %p85
      %p88 = scmp.ne.s32.totalorder %s71, %s87
      %p89 = scmp.eq.s32.totalorder %s23, 0
      %p90 = por %p88, %p89
      %s92 = sadd.s32 %s91, 1
      %p95 = scmp.eq.s32.totalorder %s17, 1
      %p96 = scmp.ne.s32.totalorder %s91, %s93
      %p97 = scmp.eq.s32.totalorder %s17, 0
      %p98 = por %p96, %p97
      %p99 = scmp.ne.s32.totalorder %s91, %s93
      %p100 = scmp.eq.s32.totalorder %s22, 1
      %p101 = por %p99, %p100
      %p102 = scmp.ne.s32.totalorder %s93, %s94
      %p103 = scmp.eq.s32.totalorder %s22, 0
      %p104 = por %p102, %p103
      %p105 = scmp.ne.s32.totalorder %s93, %s94
      %p106 = scmp.eq.s32.totalorder %s23, 1
      %p107 = por %p105, %p106
      %p109 = scmp.ne.s32.totalorder %s94, %s108
      %p110 = scmp.eq.s32.totalorder %s23, 0
      %p111 = por %p109, %p110
      %s113 = sadd.s32 %s112, 1
      %p116 = scmp.eq.s32.totalorder %s17, 1
      %p117 = scmp.ne.s32.totalorder %s112, %s114
      %p118 = scmp.eq.s32.totalorder %s17, 0
      %p119 = por %p117, %p118
      %p120 = scmp.ne.s32.totalorder %s112, %s114
      %p121 = scmp.eq.s32.totalorder %s22, 1
      %p122 = por %p120, %p121
      %p123 = scmp.ne.s32.totalorder %s114, %s115
      %p124 = scmp.eq.s32.totalorder %s22, 0
      %p125 = por %p123, %p124
      %p126 = scmp.ne.s32.totalorder %s114, %s115
      %p127 = scmp.eq.s32.totalorder %s23, 1
      %p128 = por %p126, %p127
      %p130 = scmp.ne.s32.totalorder %s115, %s129
      %p131 = scmp.eq.s32.totalorder %s23, 0
      %p132 = por %p130, %p131
      %s133 = ssub.s32 %s24, %s36
      %s134 = ssub.s32 %s25, %s32
      %s135 = sor.u32 %s133, %s134
      %p136 = scmp.eq.s32.totalorder %s135, 0
      %s138 = sadd.s32 %s137, 1
      %s139 = scalar_select %p136, %s137, %s138
      %p142 = pneg %p136
      %p143 = scmp.eq.s32.totalorder %s17, 1
      %p144 = por %p142, %p143
      %p145 = scmp.ne.s32.totalorder %s137, %s140
      %p146 = scmp.eq.s32.totalorder %s17, 0
      %p147 = por %p145, %p146
      %p148 = scmp.ne.s32.totalorder %s137, %s140
      %p149 = scmp.eq.s32.totalorder %s22, 1
      %p150 = por %p148, %p149
      %p151 = scmp.ne.s32.totalorder %s140, %s141
      %p152 = scmp.eq.s32.totalorder %s22, 0
      %p153 = por %p151, %p152
      %p154 = scmp.ne.s32.totalorder %s140, %s141
      %p155 = scmp.eq.s32.totalorder %s23, 1
      %p156 = por %p154, %p155
      %p158 = scmp.ne.s32.totalorder %s141, %s157
      %p159 = scmp.eq.s32.totalorder %s23, 0
      %p160 = por %p158, %p159
      %p161 = scmp.le.s32.totalorder 1, %s17
      %p162 = scmp.lt.s32.totalorder %s17, 3
      %p163 = pnand %p161, %p162
      %p164 = pneg %p163
      // Predicated region
      $region9: #{tpu_custom_call.1} parent=5 // pred_check
        _
      $region10: #{tpu_custom_call.1} parent=5 // pred_check_branch
        %166 = sbr.rel (%p163) target = $region12
      $region11: #{tpu_custom_call.1} parent=5 // pred_region
        %s167 = ssub.s32 %s17, 1
        // Predicated region
        $region13: #{tpu_custom_call.1} parent=11 // pred_check
          %p168 = pneg %p83
        $region14: #{tpu_custom_call.1} parent=11 // pred_check_branch
          %170 = sbr.rel (%p168) target = $region16
        $region15: #{tpu_custom_call.1} parent=11 // pred_region
          %s171 = smul.u32 2, %s27
          %s173 = ssub.s32 128, 128
          %174 = vsyncadd [#allocation6], %s173
          %s175 = smul.addr %s171, 64
          %s176 = scalar_lea.hbm %s1, %s175
          %s177 = sshll.u32 [#allocation5], 4
          %s178 = int_to_ptr.vmem [resolvable:$true] %s177
          %183 = dma.hbm_to_vmem [thread:$0]  %s176, 128, %s178, [#allocation6], 64, 64, 4
        $region16: #{tpu_custom_call.1} parent=11 // pred_fallthru
          _
        // Predicated region
        $region17: #{tpu_custom_call.1} parent=11 // pred_check
          %p184 = pneg %p104
        $region18: #{tpu_custom_call.1} parent=11 // pred_check_branch
          %186 = sbr.rel (%p184) target = $region20
        $region19: #{tpu_custom_call.1} parent=11 // pred_region
          %s188 = ssub.s32 1536, 1536
          %189 = vsyncadd [#allocation6], %s188
          %s190 = sshll.u32 [#allocation7], 4
          %s191 = int_to_ptr.vmem [resolvable:$true] %s190
          %196 = dma.hbm_to_vmem [thread:$0]  %s2, 1536, %s191, [#allocation6], 64, 64, 4
        $region20: #{tpu_custom_call.1} parent=11 // pred_fallthru
          _
        // Predicated region
        $region21: #{tpu_custom_call.1} parent=11 // pred_check
          %p197 = pneg %p125
        $region22: #{tpu_custom_call.1} parent=11 // pred_check_branch
          %199 = sbr.rel (%p197) target = $region24
        $region23: #{tpu_custom_call.1} parent=11 // pred_region
          _
        $region24: #{tpu_custom_call.1} parent=11 // pred_fallthru
          _
      $region12: #{tpu_custom_call.1} parent=5 // pred_fallthru
        _
      %p200 = scmp.lt.s32.totalorder %s17, 2
      // Predicated region
      $region25: #{tpu_custom_call.1} parent=5 // pred_check
        %p201 = pneg %p200
      $region26: #{tpu_custom_call.1} parent=5 // pred_check_branch
        %203 = sbr.rel (%p201) target = $region28
      $region27: #{tpu_custom_call.1} parent=5 // pred_region
        // Predicated region
        $region29: #{tpu_custom_call.1} parent=27 // pred_check
          %p204 = pneg %p51
        $region30: #{tpu_custom_call.1} parent=27 // pred_check_branch
          %206 = sbr.rel (%p204) target = $region32
        $region31: #{tpu_custom_call.1} parent=27 // pred_region
          %s207 = sand.u32 %s41, 1
          %s208 = scalar_lea.sflag [#allocation3], %s207
          %s209 = sand.u32 %s41, 1
          %s210 = smul.addr %s209, 16
          %s211 = scalar_lea.vmem [#allocation2], %s210
          %s212 = smul.u32 2, %s25
          %s214 = ssub.s32 256, 256
          %215 = vsyncadd %s208, %s214
          %s216 = smul.addr %s212, 2
          %s217 = smul.addr %s24, 4
          %s218 = sadd.s32 %s216, %s217
          %s219 = smul.addr %s218, 64
          %s220 = scalar_lea.hbm %s0, %s219
          %s221 = sshll.u32 %s211, 4
          %s222 = int_to_ptr.vmem [resolvable:$true] %s221
          %227 = dma.hbm_to_vmem [thread:$0]  %s220, 256, %s222, %s208, 128, 128, 8
        $region32: #{tpu_custom_call.1} parent=27 // pred_fallthru
          _
      $region28: #{tpu_custom_call.1} parent=5 // pred_fallthru
        _
      %p228 = scmp.le.s32.totalorder 1, %s17
      %p229 = scmp.lt.s32.totalorder %s17, 3
      %p230 = pnand %p228, %p229
      %p231 = pneg %p230
      // Predicated region
      $region33: #{tpu_custom_call.1} parent=5 // pred_check
        _
      $region34: #{tpu_custom_call.1} parent=5 // pred_check_branch
        %233 = sbr.rel (%p230) target = $region36
      $region35: #{tpu_custom_call.1} parent=5 // pred_region
        %s234 = ssub.s32 %s17, 1
        %s235 = sand.u32 %s44, 1
        %s236 = scalar_lea.sflag [#allocation3], %s235
        %s237 = sand.u32 %s44, 1
        %s238 = smul.addr %s237, 16
        %s239 = scalar_lea.vmem [#allocation2], %s238
        // Predicated region
        $region37: #{tpu_custom_call.1} parent=35 // pred_check
          %p240 = pneg %p57
        $region38: #{tpu_custom_call.1} parent=35 // pred_check_branch
          %242 = sbr.rel (%p240) target = $region40
        $region39: #{tpu_custom_call.1} parent=35 // pred_region
          %243 = dma.done %s236, 256
        $region40: #{tpu_custom_call.1} parent=35 // pred_fallthru
          _
        // Predicated region
        $region41: #{tpu_custom_call.1} parent=35 // pred_check
          %p244 = pneg %p83
        $region42: #{tpu_custom_call.1} parent=35 // pred_check_branch
          %246 = sbr.rel (%p244) target = $region44
        $region43: #{tpu_custom_call.1} parent=35 // pred_region
          %247 = dma.done [#allocation6], 128
        $region44: #{tpu_custom_call.1} parent=35 // pred_fallthru
          _
        // Predicated region
        $region45: #{tpu_custom_call.1} parent=35 // pred_check
          %p248 = pneg %p104
        $region46: #{tpu_custom_call.1} parent=35 // pred_check_branch
          %250 = sbr.rel (%p248) target = $region48
        $region47: #{tpu_custom_call.1} parent=35 // pred_region
          %251 = dma.done [#allocation6], 1536
        $region48: #{tpu_custom_call.1} parent=35 // pred_fallthru
          _
        %s252 = sand.u32 %s44, 1
        %s253 = scalar_lea.sflag [#allocation3], %s252
        %s254 = sand.u32 %s44, 1
        %s255 = smul.addr %s254, 16
        %s256 = scalar_lea.vmem [#allocation2], %s255
        %p257 = pneg %p57
        %p258 = pneg %p54
        %p259 = pneg %p83
        %p260 = pneg %p80
        %p261 = pneg %p104
        %p262 = pneg %p101
        %p263 = pneg %p125
        %p264 = pneg %p122
        %p265 = pneg %p153
        %p266 = pneg %p150
        %s267 = sand.u32 %s140, 1
        %s268 = scalar_lea.sflag [#allocation4], %s267
        %s269 = sand.u32 %s140, 1
        %s270 = smul.addr %s269, 8
        %s271 = scalar_lea.vmem [#allocation8], %s270
        %s272 = smul.u32 2, %s27
        %s273 = smul.u32 2, %s27
        %s274 = smul.u32 2, %s27
        %v276 = vld [vmem:[%s239] sm:$0xff]
        %v277 = vld [vmem:[%s239 + $0x8] sm:$0xff]
        %v278 = vld [vmem:[#allocation7] sm:$0xf]
        %v279 = vld [vmem:[#allocation7 + $0x4] sm:$0xf]
        %v280 = vld [vmem:[#allocation7 + $0x8] sm:$0xf]
        %v281 = vld [vmem:[#allocation7 + $0xc] sm:$0xf]
        %v282 = vld [vmem:[#allocation7 + $0x10] sm:$0xf]
        %v283 = vld [vmem:[#allocation7 + $0x14] sm:$0xf]
        %v284 = vld [vmem:[#allocation7 + $0x18] sm:$0xf]
        %v285 = vld [vmem:[#allocation7 + $0x1c] sm:$0xf]
        %v286 = vld [vmem:[#allocation7 + $0x20] sm:$0xf]
        %v287 = vld [vmem:[#allocation7 + $0x24] sm:$0xf]
        %v288 = vld [vmem:[#allocation7 + $0x28] sm:$0xf]
        %v289 = vld [vmem:[#allocation7 + $0x2c] sm:$0xf]
        %v290 = vld [vmem:[#allocation7 + $0x30] sm:$0xf]
        %v291 = vld [vmem:[#allocation7 + $0x34] sm:$0xf]
        %v292 = vld [vmem:[#allocation7 + $0x38] sm:$0xf]
        %v293 = vld [vmem:[#allocation7 + $0x3c] sm:$0xf]
        %v294 = vld [vmem:[#allocation7 + $0x40] sm:$0xf]
        %v295 = vld [vmem:[#allocation7 + $0x44] sm:$0xf]
        %v296 = vld [vmem:[#allocation7 + $0x48] sm:$0xf]
        %v297 = vld [vmem:[#allocation7 + $0x4c] sm:$0xf]
        %v298 = vld [vmem:[#allocation7 + $0x50] sm:$0xf]
        %v299 = vld [vmem:[#allocation7 + $0x54] sm:$0xf]
        %v300 = vld [vmem:[#allocation7 + $0x58] sm:$0xf]
        %v301 = vld [vmem:[#allocation7 + $0x5c] sm:$0xf]
        %v302 = vld [vmem:[%s3] sm:$0x1]
        %v304 = vlaneseq
        %v305 = vshrl.u32 %v304, 7
        %v306 = vsub.s32 0, %v305
        %v307 = vrot.slane %v302, %v306
        %v311 = vunpack.c.l.b16 %v276
        %v312 = vunpack.c.h.b16 %v276
        %v313 = vunpack.c.l.b16 %v277
        %v314 = vunpack.c.h.b16 %v277
        %v315 = vpack.c.b16 %v313, %v311
        %v316 = vpack.c.b16 %v314, %v312
        %v342 = vunpack.c.l.b16 %v278
        %v343 = vunpack.c.l.b16 %v279
        %v344 = vunpack.c.l.b16 %v280
        %v345 = vunpack.c.l.b16 %v281
        %v346 = vunpack.c.l.b16 %v282
        %v347 = vunpack.c.l.b16 %v283
        %v348 = vunpack.c.l.b16 %v284
        %v349 = vunpack.c.l.b16 %v285
        %v350 = vunpack.c.l.b16 %v286
        %v351 = vunpack.c.l.b16 %v287
        %v352 = vunpack.c.l.b16 %v288
        %v353 = vunpack.c.l.b16 %v289
        %v354 = vunpack.c.l.b16 %v290
        %v355 = vunpack.c.l.b16 %v291
        %v356 = vunpack.c.l.b16 %v292
        %v357 = vunpack.c.l.b16 %v293
        %v358 = vunpack.c.l.b16 %v294
        %v359 = vunpack.c.l.b16 %v295
        %v360 = vunpack.c.l.b16 %v296
        %v361 = vunpack.c.l.b16 %v297
        %v362 = vunpack.c.l.b16 %v298
        %v363 = vunpack.c.l.b16 %v299
        %v364 = vunpack.c.l.b16 %v300
        %v365 = vunpack.c.l.b16 %v301
        %v366 = vpack.c.b16 %v343, %v342
        %v367 = vpack.c.b16 %v345, %v344
        %v368 = vpack.c.b16 %v347, %v346
        %v369 = vpack.c.b16 %v349, %v348
        %v370 = vpack.c.b16 %v351, %v350
        %v371 = vpack.c.b16 %v353, %v352
        %v372 = vpack.c.b16 %v355, %v354
        %v373 = vpack.c.b16 %v357, %v356
        %v374 = vpack.c.b16 %v359, %v358
        %v375 = vpack.c.b16 %v361, %v360
        %v376 = vpack.c.b16 %v363, %v362
        %v377 = vpack.c.b16 %v365, %v364
        %vm390 = vcmask 523264
        %v392 = vsel %vm390, %v316, 0
        %394 = vmatprep.subr.bf16.mxu0 0
        %395 = vmatpush1.bf16.msra.mxu0 %v366
        %396 = vmatprep.subr.bf16.mxu0 0
        %397 = vmatpush1.bf16.msra.mxu0 %v367
        %398 = vmatprep.subr.bf16.mxu0 0
        %399 = vmatpush1.bf16.msra.mxu0 %v368
        %400 = vmatprep.subr.bf16.mxu0 0
        %401 = vmatpush1.bf16.msra.mxu0 %v369
        %402 = vmatprep.subr.bf16.mxu0 0
        %403 = vmatpush1.bf16.msra.mxu0 %v370
        %404 = vmatprep.subr.bf16.mxu0 0
        %405 = vmatpush1.bf16.msra.mxu0 %v371
        %406 = vmatprep.subr.bf16.mxu0 0
        %407 = vmatpush1.bf16.msra.mxu0 %v372
        %408 = vmatprep.subr.bf16.mxu0 0
        %409 = vmatpush1.bf16.msra.mxu0 %v373
        %410 = vmatprep.subr.bf16.mxu0 0
        %411 = vmatpush1.bf16.msra.mxu0 %v374
        %412 = vmatprep.subr.bf16.mxu0 0
        %413 = vmatpush1.bf16.msra.mxu0 %v375
        %414 = vmatprep.subr.bf16.mxu0 0
        %415 = vmatpush1.bf16.msra.mxu0 %v376
        %416 = vmatprep.subr.bf16.mxu0 0
        %417 = vmatpush1.bf16.msra.mxu0 %v377
        %418 = vmatprep.subr.bf16.mxu0 0
        %419 = vmatpush1.bf16.msra.mxu0 0
        %420 = vmatprep.subr.bf16.mxu0 0
        %421 = vmatpush1.bf16.msra.mxu0 0
        %422 = vmatprep.subr.bf16.mxu0 0
        %423 = vmatpush1.bf16.msra.mxu0 0
        %424 = vmatprep.subr.bf16.mxu0 0
        %425 = vmatpush1.bf16.msra.mxu0 0
        %426 = vmatprep.mubr.bf16.mxu0 %v392
        %427 = vmatmul.mubr.bf16.gmra.mrb[0].mxu0 %v315
        %v428 = vpop.f32.mrb[0].mxu0
        %v429 = vadd.f32 %v307, %v428
        %v430 = vpop.f32.mrb[0].mxu0
        %v431 = vpop.f32.mrb[0].mxu0
        %v432 = vadd.f32 %v307, %v431
        %v433 = vpop.f32.mrb[0].mxu0
        %434 = vdwg.mxu0
        %v435 = vmax.f32 %v429, 0.0
        %v436 = vmax.f32 %v432, 0.0
        %v437 = vld [vmem:[#allocation5] sm:$0xf]
        %v438 = vld [vmem:[#allocation5 + $0x4] sm:$0xf]
        %v439 = vunpack.c.l.bf16 %v437
        %v440 = vunpack.c.l.bf16 %v438
        %v441 = vadd.f32 %v435, %v439
        %v442 = vadd.f32 %v436, %v440
        %v443 = vpack.c.bf16 %v442, %v441
        %v445 = vunpack.c.l.b16 %v443
        %v446 = vunpack.c.h.b16 %v443
        %v447 = vpack.c.b16 %v445, %v445
        %v448 = vpack.c.b16 %v446, %v446
        %451 = vst [vmem:[%s271] sm:$0xf] %v447
        %452 = vst [vmem:[%s271 + $0x4] sm:$0xf] %v448
        %s453 = sand.u32 %s140, 1
        %s454 = scalar_lea.sflag [#allocation4], %s453
        %s455 = sand.u32 %s140, 1
        %s456 = smul.addr %s455, 8
        %s457 = scalar_lea.vmem [#allocation8], %s456
        // Predicated region
        $region49: #{tpu_custom_call.1} parent=35 // pred_check
          %p458 = pneg %p150
        $region50: #{tpu_custom_call.1} parent=35 // pred_check_branch
          %460 = sbr.rel (%p458) target = $region52
        $region51: #{tpu_custom_call.1} parent=35 // pred_region
          %s461 = smul.u32 2, %s27
          %s463 = ssub.s32 128, 128
          %464 = vsyncadd %s454, %s463
          %s465 = smul.addr %s26, 2
          %s466 = sadd.s32 %s461, %s465
          %s467 = smul.addr %s466, 64
          %s468 = scalar_lea.hbm %s4, %s467
          %s469 = sshll.u32 %s457, 4
          %s470 = int_to_ptr.vmem [resolvable:$true] %s469
          %475 = dma.vmem_to_hbm [thread:$0]  %s470, 128, %s468, %s454, 64, 64, 4
        $region52: #{tpu_custom_call.1} parent=35 // pred_fallthru
          _
      $region36: #{tpu_custom_call.1} parent=5 // pred_fallthru
        _
      %p476 = scmp.le.s32.totalorder 2, %s17
      // Predicated region
      $region53: #{tpu_custom_call.1} parent=5 // pred_check
        %p477 = pneg %p476
      $region54: #{tpu_custom_call.1} parent=5 // pred_check_branch
        %479 = sbr.rel (%p477) target = $region56
      $region55: #{tpu_custom_call.1} parent=5 // pred_region
        %s480 = ssub.s32 %s17, 2
        // Predicated region
        $region57: #{tpu_custom_call.1} parent=55 // pred_check
          %p481 = pneg %p156
        $region58: #{tpu_custom_call.1} parent=55 // pred_check_branch
          %483 = sbr.rel (%p481) target = $region60
        $region59: #{tpu_custom_call.1} parent=55 // pred_region
          %s484 = sand.u32 %s141, 1
          %s485 = scalar_lea.sflag [#allocation4], %s484
          %s486 = sand.u32 %s141, 1
          %s487 = smul.addr %s486, 8
          %s488 = scalar_lea.vmem [#allocation8], %s487
          %489 = dma.done %s485, 128
        $region60: #{tpu_custom_call.1} parent=55 // pred_fallthru
          _
      $region56: #{tpu_custom_call.1} parent=5 // pred_fallthru
        _
    $region6: #{tpu_custom_call.1} parent=1 // loop_footer
      %s21 = sadd.s32 1, %s17
    $region7: #{tpu_custom_call.1} parent=1 // loop_footer_branch
      %16 = sbr.rel target = $region3
    $region8: #{tpu_custom_call.1} parent=1 // loop_exit
      _
    %490 = vsyncpa [#allocation3], 1
    %s491 = scalar_lea.sflag [#allocation3], 1
    %492 = vsyncpa %s491, 1
    %493 = vsyncpa [#allocation6], 1
    %494 = vsyncpa [#allocation4], 1
    %s495 = scalar_lea.sflag [#allocation4], 1
    %496 = vsyncpa %s495, 1

</llo_original>
